<compile_context>
chip_gen: v7x
topology: tpu7x:2x2x1
jax: 0.10.0
libtpu: 0.0.40
codegen_flags: <defaults>
</compile_context>

<pallas_src>
import numpy as np
import jax
import jax.numpy as jnp
from jax.experimental import pallas as pl
from jax.experimental.pallas import tpu as pltpu

LEVELS = [8, 5, 5, 5]
DIM = 8                        # input/output feature dim (has projections)
NUM_CODEBOOKS = 1
CODEBOOK_DIM = len(LEVELS)
ECD = CODEBOOK_DIM * NUM_CODEBOOKS   # 4
W_FUSED_ROWS = 16              # DIM out rows + 1 index row, padded to 2 sublane tiles
EPS = 1e-3
TILE_N = 32768                 # default pixels per grid step (lane axis), mult. of 128


def fsq_kernel(z_ref, w_in_ref, b_in_ref, half_l_ref, offset_ref,
               w_out_ref, b_out_ref, out_ref, idx_ref):
    # z: (DIM, TN) -- features on sublanes, pixels on lanes (native NCHW slab).
    z = z_ref[...]
    # project_in with bound()'s shift folded into the bias:
    #   zp = W_in_pad @ z + (b_in + shift)
    zp = jnp.dot(w_in_ref[...], z, preferred_element_type=jnp.float32) + b_in_ref[...]
    # bound() + round_ste (forward): q are the rounded integer code levels.
    q = jnp.round(jnp.tanh(zp) * half_l_ref[...] - offset_ref[...])
    # Fused project_out + codes_to_indices acting on q (1/half_width folded into W):
    #   rows 0..DIM-1 : out   = (W_out / half_width) @ q + b_out      (== W_out @ codes)
    #   row  DIM      : index = basis . q + sum(half_width * basis)   (== codes_to_indices)
    res = jnp.dot(w_out_ref[...], q, preferred_element_type=jnp.float32) + b_out_ref[...]
    out_ref[...] = res[:DIM].astype(out_ref.dtype)
    idx_ref[...] = jnp.round(res[DIM:DIM + 1]).astype(jnp.int32)


def _round_up(x, m):
    return (x + m - 1) // m * m


def make_fsq_params(key):
    """Build padded/fused kernel parameters + raw Linear weights (mirrors __init__)."""
    levels = np.array(LEVELS, dtype=np.int64)
    basis = np.cumprod([1] + LEVELS[:-1]).astype(np.float32)        # [1, 8, 40, 200]
    half_l = (levels - 1).astype(np.float32) * (1.0 + EPS) / 2.0
    offset = np.where(levels % 2 == 0, 0.5, 0.0).astype(np.float32)
    shift = np.arctanh(offset / half_l).astype(np.float32)
    half_width = (levels // 2).astype(np.float32)                   # [4, 2, 2, 2]

    k1, k2, k3, k4 = jax.random.split(key, 4)
    # nn.Linear init: uniform(+-1/sqrt(fan_in)); weight shape (out_features, in_features)
    lim_in = 1.0 / np.sqrt(DIM)
    w_in = np.asarray(jax.random.uniform(k1, (ECD, DIM), jnp.float32, -lim_in, lim_in))
    b_in = np.asarray(jax.random.uniform(k2, (ECD,), jnp.float32, -lim_in, lim_in))
    lim_out = 1.0 / np.sqrt(ECD)
    w_out = np.asarray(jax.random.uniform(k3, (DIM, ECD), jnp.float32, -lim_out, lim_out))
    b_out = np.asarray(jax.random.uniform(k4, (DIM,), jnp.float32, -lim_out, lim_out))

    # project_in padded to (DIM, DIM); codebook-pad rows 4..7 stay zero.
    w_in_pad = np.zeros((DIM, DIM), np.float32)
    w_in_pad[:ECD, :] = w_in
    b_in_shift = np.zeros((DIM, 1), np.float32)
    b_in_shift[:ECD, 0] = b_in + shift              # fold bound()'s shift into the bias

    half_l_pad = np.ones((DIM, 1), np.float32)      # pad rows: tanh(0)*1 - 0 -> q = 0
    half_l_pad[:ECD, 0] = half_l
    offset_pad = np.zeros((DIM, 1), np.float32)
    offset_pad[:ECD, 0] = offset

    # Fused project_out + codes_to_indices on the rounded integer codes q.
    w_fused = np.zeros((W_FUSED_ROWS, DIM), np.float32)
    w_fused[:DIM, :ECD] = w_out / half_width[None, :]
    w_fused[DIM, :ECD] = basis
    b_fused = np.zeros((W_FUSED_ROWS, 1), np.float32)
    b_fused[:DIM, 0] = b_out
    b_fused[DIM, 0] = float(np.sum(half_width * basis))             # == 500

    kernel_params = dict(
        w_in=jnp.asarray(w_in_pad),
        b_in_shift=jnp.asarray(b_in_shift),
        half_l=jnp.asarray(half_l_pad),
        offset=jnp.asarray(offset_pad),
        w_out_fused=jnp.asarray(w_fused),
        b_out_fused=jnp.asarray(b_fused),
    )
    raw_params = dict(w_in=w_in, b_in=b_in, w_out=w_out, b_out=b_out)
    return kernel_params, raw_params


def fsq_forward(x_nchw, params, tile_n=TILE_N):
    """Replicates FSQuantizer.forward for an image input (B, D, H, W)."""
    B, D, H, W = x_nchw.shape
    assert D == DIM
    S = H * W
    # NCHW viewed as (B, D, S): free reshape, no transpose, no feature padding in HBM.
    z = x_nchw.reshape(B, D, S).astype(jnp.float32)
    TN = min(tile_n, _round_up(S, 128))
    Sp = _round_up(S, TN)
    if Sp != S:
        z = jnp.pad(z, ((0, 0), (0, 0), (0, Sp - S)))

    grid = (B, Sp // TN)

    def pix_spec(rows):     # (1, rows, TN) tile, leading batch dim squeezed
        return pl.BlockSpec((None, rows, TN), lambda b, s: (b, 0, s))

    def const_spec(shape):  # full tiny parameter block, never re-fetched across steps
        return pl.BlockSpec(shape, lambda b, s: (0,) * len(shape))

    out, idx = pl.pallas_call(
        fsq_kernel,
        out_shape=(
            jax.ShapeDtypeStruct((B, DIM, Sp), jnp.float32),
            jax.ShapeDtypeStruct((B, 1, Sp), jnp.int32),
        ),
        grid_spec=pltpu.PrefetchScalarGridSpec(
            num_scalar_prefetch=0,
            grid=grid,
            in_specs=[
                pix_spec(DIM),                      # z block (DIM, TN)
                const_spec((DIM, DIM)),             # W_in (padded)
                const_spec((DIM, 1)),               # b_in + shift
                const_spec((DIM, 1)),               # half_l
                const_spec((DIM, 1)),               # offset
                const_spec((W_FUSED_ROWS, DIM)),    # fused W_out / index row
                const_spec((W_FUSED_ROWS, 1)),      # fused b_out / index constant
            ],
            out_specs=[
                pix_spec(DIM),                      # out (DIM, TN), already NCHW order
                pix_spec(1),                        # indices: lane-dense int32 row
            ],
        ),
        compiler_params=pltpu.CompilerParams(
            dimension_semantics=("parallel", "parallel")),
    )(z, params["w_in"], params["b_in_shift"], params["half_l"],
      params["offset"], params["w_out_fused"], params["b_out_fused"])

    out = out[:, :, :S].reshape(B, DIM, H, W)          # already b d h w
    indices = idx[:, 0, :S].reshape(B, H, W)           # keep_num_codebooks_dim=False
    dummy_loss = jnp.zeros((B, 1, 1, 1), jnp.float32)
    return indices, out, dummy_loss


def fsq_reference(x_nchw, raw):
    """Pure-JAX replica of FSQuantizer.forward (image path) for validation."""
    B, D, H, W = x_nchw.shape
    levels = np.array(LEVELS, dtype=np.int64)
    basis = np.cumprod([1] + LEVELS[:-1]).astype(np.float32)
    half_l = (levels - 1).astype(np.float32) * (1.0 + EPS) / 2.0
    offset = np.where(levels % 2 == 0, 0.5, 0.0).astype(np.float32)
    shift = np.arctanh(offset / half_l).astype(np.float32)
    half_w = (levels // 2).astype(np.float32)

    z = jnp.transpose(x_nchw, (0, 2, 3, 1)).reshape(B, H * W, D)     # b d h w -> b (h w) d
    zp = z @ raw["w_in"].T + raw["b_in"]                             # project_in
    q = jnp.round(jnp.tanh(zp + shift) * half_l - offset)            # bound + round_ste fwd
    codes = q / half_w
    idx = jnp.round(jnp.sum((codes * half_w + half_w) * basis, axis=-1)).astype(jnp.int32)
    out = codes @ raw["w_out"].T + raw["b_out"]                      # project_out
    out = jnp.transpose(out.reshape(B, H, W, D), (0, 3, 1, 2))       # -> b d h w
    return idx.reshape(B, H, W), out


if __name__ == "__main__":
    key = jax.random.PRNGKey(0)
    k_param, k_x = jax.random.split(key)
    params, raw = make_fsq_params(k_param)

    # NCHW input, matching the PyTorch convention: (batch=2, channels=dim=8, 16, 16)
    x = jax.random.normal(k_x, (2, DIM, 16, 16), dtype=jnp.float32)

    indices, out, dummy_loss = jax.jit(fsq_forward)(x, params)
    jax.block_until_ready((indices, out, dummy_loss))

    assert indices.shape == (2, 16, 16) and indices.dtype == jnp.int32
    assert out.shape == (2, DIM, 16, 16) and out.dtype == jnp.float32
    assert dummy_loss.shape == (2, 1, 1, 1)
    assert int(jnp.min(indices)) >= 0 and int(jnp.max(indices)) < 1000

    # Validate against the pure-JAX reference.  Tolerances allow the (vanishingly
    # rare) case of a 1-ulp tanh difference flipping a code at a .5 rounding boundary.
    ref_idx, ref_out = fsq_reference(x, raw)
    idx_match = float(jnp.mean((indices == ref_idx).astype(jnp.float32)))
    out_err = float(jnp.mean(jnp.abs(out - ref_out)))
    assert idx_match >= 0.99, f"index match fraction {idx_match}"
    assert out_err < 1e-2, f"mean |out - ref| = {out_err}"

    print("KERNEL_OK")
</pallas_src>

<mosaic_0001>
module attributes {stable_mosaic.version = 11 : i64} {
  func.func @fsq_kernel(%arg0: i32, %arg1: i32, %arg2: memref<1x8x256xf32, #tpu.memory_space<vmem>>, %arg3: memref<8x8xf32, #tpu.memory_space<vmem>>, %arg4: memref<8x1xf32, #tpu.memory_space<vmem>>, %arg5: memref<8x1xf32, #tpu.memory_space<vmem>>, %arg6: memref<8x1xf32, #tpu.memory_space<vmem>>, %arg7: memref<16x8xf32, #tpu.memory_space<vmem>>, %arg8: memref<16x1xf32, #tpu.memory_space<vmem>>, %arg9: memref<1x8x256xf32, #tpu.memory_space<vmem>>, %arg10: memref<1x1x256xi32, #tpu.memory_space<vmem>>) attributes {dimension_semantics = [#tpu.dimension_semantics<parallel>, #tpu.dimension_semantics<parallel>], iteration_bounds = array<i64: 2, 1>, scalar_prefetch = 0 : i64, scratch_operands = 0 : i64, tpu.core_type = #tpu.core_type<tc>, window_params = [{transform_indices = @transform_0, window_bounds = array<i64: 1, 8, 256>}, {pipeline_mode = #tpu.pipeline_mode<synchronous>, transform_indices = @transform_1, window_bounds = array<i64: 8, 8>}, {pipeline_mode = #tpu.pipeline_mode<synchronous>, transform_indices = @transform_2, window_bounds = array<i64: 8, 1>}, {pipeline_mode = #tpu.pipeline_mode<synchronous>, transform_indices = @transform_3, window_bounds = array<i64: 8, 1>}, {pipeline_mode = #tpu.pipeline_mode<synchronous>, transform_indices = @transform_4, window_bounds = array<i64: 8, 1>}, {pipeline_mode = #tpu.pipeline_mode<synchronous>, transform_indices = @transform_5, window_bounds = array<i64: 16, 8>}, {pipeline_mode = #tpu.pipeline_mode<synchronous>, transform_indices = @transform_6, window_bounds = array<i64: 16, 1>}, {transform_indices = @transform_7, window_bounds = array<i64: 1, 8, 256>}, {transform_indices = @transform_8, window_bounds = array<i64: 1, 1, 256>}]} {
    %c0 = arith.constant 0 : index
    %c0_0 = arith.constant 0 : index
    %c0_1 = arith.constant 0 : index
    %0 = vector.load %arg2[%c0, %c0_0, %c0_1] : memref<1x8x256xf32, #tpu.memory_space<vmem>>, vector<1x8x256xf32>
    %1 = vector.shape_cast %0 : vector<1x8x256xf32> to vector<8x256xf32>
    %c0_2 = arith.constant 0 : index
    %c0_3 = arith.constant 0 : index
    %2 = vector.load %arg3[%c0_2, %c0_3] : memref<8x8xf32, #tpu.memory_space<vmem>>, vector<8x8xf32>
    %cst = arith.constant dense<0.000000e+00> : vector<8x256xf32>
    %3 = tpu.matmul %2, %1, %cst {dimension_numbers = #tpu.dot_dimension_numbers<[1], [0], [0], [1], [0, 0, 1, 1], [], []>} : vector<8x8xf32>, vector<8x256xf32>, vector<8x256xf32> -> vector<8x256xf32>
    %c0_4 = arith.constant 0 : index
    %c0_5 = arith.constant 0 : index
    %4 = vector.load %arg4[%c0_4, %c0_5] : memref<8x1xf32, #tpu.memory_space<vmem>>, vector<8x1xf32>
    %5 = vector.broadcast %4 : vector<8x1xf32> to vector<8x256xf32>
    %6 = arith.addf %3, %5 : vector<8x256xf32>
    %7 = math.tanh %6 : vector<8x256xf32>
    %c0_6 = arith.constant 0 : index
    %c0_7 = arith.constant 0 : index
    %8 = vector.load %arg5[%c0_6, %c0_7] : memref<8x1xf32, #tpu.memory_space<vmem>>, vector<8x1xf32>
    %9 = vector.broadcast %8 : vector<8x1xf32> to vector<8x256xf32>
    %10 = arith.mulf %7, %9 : vector<8x256xf32>
    %c0_8 = arith.constant 0 : index
    %c0_9 = arith.constant 0 : index
    %11 = vector.load %arg6[%c0_8, %c0_9] : memref<8x1xf32, #tpu.memory_space<vmem>>, vector<8x1xf32>
    %12 = vector.broadcast %11 : vector<8x1xf32> to vector<8x256xf32>
    %13 = arith.subf %10, %12 : vector<8x256xf32>
    %14 = math.roundeven %13 : vector<8x256xf32>
    %c0_10 = arith.constant 0 : index
    %c0_11 = arith.constant 0 : index
    %15 = vector.load %arg7[%c0_10, %c0_11] : memref<16x8xf32, #tpu.memory_space<vmem>>, vector<16x8xf32>
    %cst_12 = arith.constant dense<0.000000e+00> : vector<16x256xf32>
    %16 = tpu.matmul %15, %14, %cst_12 {dimension_numbers = #tpu.dot_dimension_numbers<[1], [0], [0], [1], [0, 0, 1, 1], [], []>} : vector<16x8xf32>, vector<8x256xf32>, vector<16x256xf32> -> vector<16x256xf32>
    %c0_13 = arith.constant 0 : index
    %c0_14 = arith.constant 0 : index
    %17 = vector.load %arg8[%c0_13, %c0_14] : memref<16x1xf32, #tpu.memory_space<vmem>>, vector<16x1xf32>
    %18 = vector.broadcast %17 : vector<16x1xf32> to vector<16x256xf32>
    %19 = arith.addf %16, %18 : vector<16x256xf32>
    %20 = vector.extract_strided_slice %19 {offsets = [0, 0], sizes = [8, 256], strides = [1, 1]} : vector<16x256xf32> to vector<8x256xf32>
    %c0_15 = arith.constant 0 : index
    %c0_16 = arith.constant 0 : index
    %c0_17 = arith.constant 0 : index
    %21 = vector.load %arg9[%c0_15, %c0_16, %c0_17] : memref<1x8x256xf32, #tpu.memory_space<vmem>>, vector<1x8x256xf32>
    %22 = vector.shape_cast %21 : vector<1x8x256xf32> to vector<8x256xf32>
    %23 = vector.shape_cast %20 : vector<8x256xf32> to vector<1x8x256xf32>
    tpu.vector_store %arg9[%c0_15, %c0_16, %c0_17], %23 {strides = array<i32>} : memref<1x8x256xf32, #tpu.memory_space<vmem>>, vector<1x8x256xf32>,
    %24 = vector.extract_strided_slice %19 {offsets = [8, 0], sizes = [1, 256], strides = [1, 1]} : vector<16x256xf32> to vector<1x256xf32>
    %25 = math.roundeven %24 : vector<1x256xf32>
    %26 = arith.fptosi %25 : vector<1x256xf32> to vector<1x256xi32>
    %c0_18 = arith.constant 0 : index
    %c0_19 = arith.constant 0 : index
    %c0_20 = arith.constant 0 : index
    %27 = vector.load %arg10[%c0_18, %c0_19, %c0_20] : memref<1x1x256xi32, #tpu.memory_space<vmem>>, vector<1x1x256xi32>
    %28 = vector.shape_cast %27 : vector<1x1x256xi32> to vector<1x256xi32>
    %29 = vector.shape_cast %26 : vector<1x256xi32> to vector<1x1x256xi32>
    tpu.vector_store %arg10[%c0_18, %c0_19, %c0_20], %29 {strides = array<i32>} : memref<1x1x256xi32, #tpu.memory_space<vmem>>, vector<1x1x256xi32>,
    return
  }
  func.func @transform_0(%arg0: i32, %arg1: i32) -> (i32, i32, i32) {
    %c0_i32 = arith.constant 0 : i32
    %c0_i32_0 = arith.constant 0 : i32
    return %arg0, %c0_i32, %arg1 : i32, i32, i32
  }
  func.func @transform_1(%arg0: i32, %arg1: i32) -> (i32, i32) {
    %c0_i32 = arith.constant 0 : i32
    %c0_i32_0 = arith.constant 0 : i32
    %c0_i32_1 = arith.constant 0 : i32
    return %c0_i32, %c0_i32_0 : i32, i32
  }
  func.func @transform_2(%arg0: i32, %arg1: i32) -> (i32, i32) {
    %c0_i32 = arith.constant 0 : i32
    %c0_i32_0 = arith.constant 0 : i32
    %c0_i32_1 = arith.constant 0 : i32
    return %c0_i32, %c0_i32_0 : i32, i32
  }
  func.func @transform_3(%arg0: i32, %arg1: i32) -> (i32, i32) {
    %c0_i32 = arith.constant 0 : i32
    %c0_i32_0 = arith.constant 0 : i32
    %c0_i32_1 = arith.constant 0 : i32
    return %c0_i32, %c0_i32_0 : i32, i32
  }
  func.func @transform_4(%arg0: i32, %arg1: i32) -> (i32, i32) {
    %c0_i32 = arith.constant 0 : i32
    %c0_i32_0 = arith.constant 0 : i32
    %c0_i32_1 = arith.constant 0 : i32
    return %c0_i32, %c0_i32_0 : i32, i32
  }
  func.func @transform_5(%arg0: i32, %arg1: i32) -> (i32, i32) {
    %c0_i32 = arith.constant 0 : i32
    %c0_i32_0 = arith.constant 0 : i32
    %c0_i32_1 = arith.constant 0 : i32
    return %c0_i32, %c0_i32_0 : i32, i32
  }
  func.func @transform_6(%arg0: i32, %arg1: i32) -> (i32, i32) {
    %c0_i32 = arith.constant 0 : i32
    %c0_i32_0 = arith.constant 0 : i32
    %c0_i32_1 = arith.constant 0 : i32
    return %c0_i32, %c0_i32_0 : i32, i32
  }
  func.func @transform_7(%arg0: i32, %arg1: i32) -> (i32, i32, i32) {
    %c0_i32 = arith.constant 0 : i32
    %c0_i32_0 = arith.constant 0 : i32
    return %arg0, %c0_i32, %arg1 : i32, i32, i32
  }
  func.func @transform_8(%arg0: i32, %arg1: i32) -> (i32, i32, i32) {
    %c0_i32 = arith.constant 0 : i32
    %c0_i32_0 = arith.constant 0 : i32
    return %arg0, %c0_i32, %arg1 : i32, i32, i32
  }
}

</mosaic_0001>

<llo_original>
// kernel: squeeze.1
$region0: #{squeeze.1}
  %s0 = inlined_call_operand.vmem [shape: s32[2,256], index: 0, kind: input, shape index: {}]
  %s1 = inlined_call_operand.hbm [shape: s32[2,16,16], index: 1, kind: output, shape index: {}]
  $region1: #{squeeze.1} parent=0
    #allocation0 [shape = 'u8[16384]{0}', space=vmem, size = 0x4000, scoped, tag = 'operand span for operand 1']
    #allocation1 [shape = 's32[1]{0}', space=sflag, size = 0x4, scoped, tag = 'scoped memory for squeeze.1']
    #allocation2 [shape = 'u8[8192]{0}', space=vmem, size = 0x2000, scoped, tag = 'scoped mem for input reshape']
    %2 = vsyncpa [#allocation1], 0
    %s4 = sshllo.u32 0, 2
    %s5 = scalar_lea.vmem %s0, 2
    %v6 = vld [vmem:[%s5] sm:%s4]
    %s7 = scalar_lea.vmem [#allocation2], 8
    %8 = vst [vmem:[%s7] sm:%s4] %v6
    %v9 = vld [vmem:[%s0] sm:%s4]
    %10 = vst [vmem:[#allocation2] sm:%s4] %v9
    %v11 = vld [vmem:[#allocation2] sm:$0x3]
    %vm12 = vcmask 130048
    %13 = vst.msk [vmem:[#allocation0] ss:$16 sm:$0x3] %vm12, %v11
    %s14 = scalar_lea.vmem [#allocation2], 8
    %v15 = vld [vmem:[%s14] sm:$0x3]
    %vm16 = vcmask 130048
    %s17 = scalar_lea.vmem [#allocation0], 8
    %18 = vst.msk [vmem:[%s17] ss:$16 sm:$0x3] %vm16, %v15
    %v19 = vld.sshfl [vmem:[#allocation2] sm:$0xff pattern:$0x99999180]
    %20 = vrot.lane.b32.xlu0 %v19, 112
    %v21 = vpop.permute.xlu0 %20
    %vm22 = vcmask 130048
    %s23 = scalar_lea.vmem [#allocation0], 1
    %24 = vst.msk [vmem:[%s23] ss:$8 sm:$0xf] %vm22, %v21
    %v25 = vld.sshfl [vmem:[#allocation2] sm:$0xff pattern:$0x99999180]
    %26 = vrot.lane.b32.xlu0 %v25, 96
    %v27 = vpop.permute.xlu0 %26
    %vm28 = vcmask 130048
    %s29 = scalar_lea.vmem [#allocation0], 2
    %30 = vst.msk [vmem:[%s29] ss:$8 sm:$0xf] %vm28, %v27
    %v31 = vld.sshfl [vmem:[#allocation2] sm:$0xff pattern:$0x99999180]
    %32 = vrot.lane.b32.xlu0 %v31, 80
    %v33 = vpop.permute.xlu0 %32
    %vm34 = vcmask 130048
    %s35 = scalar_lea.vmem [#allocation0], 3
    %36 = vst.msk [vmem:[%s35] ss:$8 sm:$0xf] %vm34, %v33
    %v37 = vld.sshfl [vmem:[#allocation2] sm:$0xff pattern:$0x99999180]
    %38 = vrot.lane.b32.xlu0 %v37, 64
    %v39 = vpop.permute.xlu0 %38
    %vm40 = vcmask 130048
    %s41 = scalar_lea.vmem [#allocation0], 4
    %42 = vst.msk [vmem:[%s41] ss:$8 sm:$0xf] %vm40, %v39
    %v43 = vld.sshfl [vmem:[#allocation2] sm:$0xff pattern:$0x99999180]
    %44 = vrot.lane.b32.xlu0 %v43, 48
    %v45 = vpop.permute.xlu0 %44
    %vm46 = vcmask 130048
    %s47 = scalar_lea.vmem [#allocation0], 5
    %48 = vst.msk [vmem:[%s47] ss:$8 sm:$0xf] %vm46, %v45
    %v49 = vld.sshfl [vmem:[#allocation2] sm:$0xff pattern:$0x99999180]
    %50 = vrot.lane.b32.xlu0 %v49, 32
    %v51 = vpop.permute.xlu0 %50
    %vm52 = vcmask 130048
    %s53 = scalar_lea.vmem [#allocation0], 6
    %54 = vst.msk [vmem:[%s53] ss:$8 sm:$0xf] %vm52, %v51
    %v55 = vld.sshfl [vmem:[#allocation2] sm:$0xff pattern:$0x99999180]
    %56 = vrot.lane.b32.xlu0 %v55, 16
    %v57 = vpop.permute.xlu0 %56
    %vm58 = vcmask 130048
    %s59 = scalar_lea.vmem [#allocation0], 7
    %60 = vst.msk [vmem:[%s59] ss:$8 sm:$0xf] %vm58, %v57
    %s62 = ssub.s32 512, 512
    %63 = vsyncadd [#allocation1], %s62
    %s65 = sshll.u32 [#allocation0], 4
    %s66 = int_to_ptr.vmem [resolvable:$true] %s65
    %68 = dma.vmem_to_hbm [thread:$0]  %s66, 512, %s1, [#allocation1]
    %69 = dma.done [#allocation1], 512
    %70 = vsyncpa [#allocation1], 1

// kernel: fsq_forward.1
$region0: #{fsq_forward.1}
  #allocation0 [shape = 'u32[]', space=smem, size = 0x4, offset = 0x4, fixed_abs, tag = 'smem constant byte address 0x4 - core index']
  #allocation1 [shape = 'u32[144,128]{1,0:T(1,128)}', space=vmem, size = 0x12000, scoped, tag = 'internal scratch']
  %s0 = inlined_call_operand.vmem [shape: f32[2,8,256], index: 0, kind: input, shape index: {}]
  %s1 = inlined_call_operand.vmem [shape: f32[8,8], index: 1, kind: input, shape index: {}]
  %s2 = inlined_call_operand.vmem [shape: f32[8,1], index: 2, kind: input, shape index: {}]
  %s3 = inlined_call_operand.vmem [shape: f32[8,1], index: 3, kind: input, shape index: {}]
  %s4 = inlined_call_operand.vmem [shape: f32[8,1], index: 4, kind: input, shape index: {}]
  %s5 = inlined_call_operand.vmem [shape: f32[16,8], index: 5, kind: input, shape index: {}]
  %s6 = inlined_call_operand.vmem [shape: f32[16,1], index: 6, kind: input, shape index: {}]
  %s7 = inlined_call_operand.vmem [shape: f32[2,8,256], index: 7, kind: output, shape index: {0}]
  %s8 = inlined_call_operand.vmem [shape: s32[2,1,256], index: 8, kind: output, shape index: {1}]
  %9 = xla_tuple %s7, %s8
  %s10 = sld [smem:[#allocation0]]
  $region69: #{fsq_forward.1} parent=0
    _
  %s12 = ssub.s32 1, %s10
  %s13 = scalar_select 0, %s12, %s10
  loop: start=0, step=1, limit=4
  $region2: #{fsq_forward.1} parent=0 // loop_pre_header
    _
  $region3: #{fsq_forward.1} parent=0 // loop_header
    %s15 = sphi 0, %s19
    %p16 = scmp.ge.s32.totalorder %s15, 4
    %s22 = sphi 0, %s34
    %s23 = sphi 0, %s30
    %s24 = sphi 0, %s22
    %s25 = sphi 0, %s23
    %s26 = sphi 0, %s24
    %s27 = sphi 0, %s25
    %s39 = sphi 0, %s41
    %s42 = sphi 0, %s39
    %s43 = sphi 0, %s42
    %s59 = sphi 0, %s43
    %s63 = sphi 0, %s63
    %s65 = sphi 0, %s63
    %s66 = sphi 0, %s65
    %s80 = sphi 0, %s66
    %s84 = sphi 0, %s84
    %s86 = sphi 0, %s84
    %s87 = sphi 0, %s86
    %s101 = sphi 0, %s87
    %s105 = sphi 0, %s105
    %s107 = sphi 0, %s105
    %s108 = sphi 0, %s107
    %s122 = sphi 0, %s108
    %s126 = sphi 0, %s126
    %s128 = sphi 0, %s126
    %s129 = sphi 0, %s128
    %s143 = sphi 0, %s129
    %s147 = sphi 0, %s147
    %s149 = sphi 0, %s147
    %s150 = sphi 0, %s149
    %s164 = sphi 0, %s150
    %s168 = sphi 0, %s168
    %s170 = sphi 0, %s168
    %s171 = sphi 0, %s170
    %s185 = sphi 0, %s171
    %s193 = sphi 0, %s195
    %s196 = sphi 0, %s193
    %s197 = sphi 0, %s196
    %s213 = sphi 0, %s197
    %s221 = sphi 0, %s223
    %s224 = sphi 0, %s221
    %s225 = sphi 0, %s224
    %s241 = sphi 0, %s225
  $region4: #{fsq_forward.1} parent=0 // loop_header_branch
    %18 = sbr.rel (%p16) target = $region8
  $region5: #{fsq_forward.1} parent=0 // loop_body
    %s20 = ssub.s32 %s15, 1
    %s21 = ssub.s32 %s15, 2
    %s28 = sadd.s32 1, %s23
    %p29 = scmp.ge.s32.totalorder %s28, 1
    %s30 = scalar_select %p29, 0, %s28
    %s31 = sadd.s32 1, %s22
    %s32 = scalar_select %p29, %s31, %s22
    %p33 = scmp.ge.s32.totalorder %s32, 2
    %s34 = scalar_select %p33, 0, %s32
    %s35 = ssub.s32 %s22, %s34
    %s36 = ssub.s32 %s23, %s30
    %s37 = sor.u32 %s35, %s36
    %p38 = scmp.eq.s32.totalorder %s37, 0
    %s40 = sadd.s32 %s39, 1
    %s41 = scalar_select %p38, %s39, %s40
    %p44 = pneg %p38
    %p45 = scmp.eq.s32.totalorder %s15, 1
    %p46 = por %p44, %p45
    %p47 = scmp.ne.s32.totalorder %s39, %s42
    %p48 = scmp.eq.s32.totalorder %s15, 0
    %p49 = por %p47, %p48
    %p50 = scmp.ne.s32.totalorder %s39, %s42
    %p51 = scmp.eq.s32.totalorder %s20, 1
    %p52 = por %p50, %p51
    %p53 = scmp.ne.s32.totalorder %s42, %s43
    %p54 = scmp.eq.s32.totalorder %s20, 0
    %p55 = por %p53, %p54
    %p56 = scmp.ne.s32.totalorder %s42, %s43
    %p57 = scmp.eq.s32.totalorder %s21, 1
    %p58 = por %p56, %p57
    %p60 = scmp.ne.s32.totalorder %s43, %s59
    %p61 = scmp.eq.s32.totalorder %s21, 0
    %p62 = por %p60, %p61
    %s64 = sadd.s32 %s63, 1
    %p67 = scmp.eq.s32.totalorder %s15, 1
    %p68 = scmp.ne.s32.totalorder %s63, %s65
    %p69 = scmp.eq.s32.totalorder %s15, 0
    %p70 = por %p68, %p69
    %p71 = scmp.ne.s32.totalorder %s63, %s65
    %p72 = scmp.eq.s32.totalorder %s20, 1
    %p73 = por %p71, %p72
    %p74 = scmp.ne.s32.totalorder %s65, %s66
    %p75 = scmp.eq.s32.totalorder %s20, 0
    %p76 = por %p74, %p75
    %p77 = scmp.ne.s32.totalorder %s65, %s66
    %p78 = scmp.eq.s32.totalorder %s21, 1
    %p79 = por %p77, %p78
    %p81 = scmp.ne.s32.totalorder %s66, %s80
    %p82 = scmp.eq.s32.totalorder %s21, 0
    %p83 = por %p81, %p82
    %s85 = sadd.s32 %s84, 1
    %p88 = scmp.eq.s32.totalorder %s15, 1
    %p89 = scmp.ne.s32.totalorder %s84, %s86
    %p90 = scmp.eq.s32.totalorder %s15, 0
    %p91 = por %p89, %p90
    %p92 = scmp.ne.s32.totalorder %s84, %s86
    %p93 = scmp.eq.s32.totalorder %s20, 1
    %p94 = por %p92, %p93
    %p95 = scmp.ne.s32.totalorder %s86, %s87
    %p96 = scmp.eq.s32.totalorder %s20, 0
    %p97 = por %p95, %p96
    %p98 = scmp.ne.s32.totalorder %s86, %s87
    %p99 = scmp.eq.s32.totalorder %s21, 1
    %p100 = por %p98, %p99
    %p102 = scmp.ne.s32.totalorder %s87, %s101
    %p103 = scmp.eq.s32.totalorder %s21, 0
    %p104 = por %p102, %p103
    %s106 = sadd.s32 %s105, 1
    %p109 = scmp.eq.s32.totalorder %s15, 1
    %p110 = scmp.ne.s32.totalorder %s105, %s107
    %p111 = scmp.eq.s32.totalorder %s15, 0
    %p112 = por %p110, %p111
    %p113 = scmp.ne.s32.totalorder %s105, %s107
    %p114 = scmp.eq.s32.totalorder %s20, 1
    %p115 = por %p113, %p114
    %p116 = scmp.ne.s32.totalorder %s107, %s108
    %p117 = scmp.eq.s32.totalorder %s20, 0
    %p118 = por %p116, %p117
    %p119 = scmp.ne.s32.totalorder %s107, %s108
    %p120 = scmp.eq.s32.totalorder %s21, 1
    %p121 = por %p119, %p120
    %p123 = scmp.ne.s32.totalorder %s108, %s122
    %p124 = scmp.eq.s32.totalorder %s21, 0
    %p125 = por %p123, %p124
    %s127 = sadd.s32 %s126, 1
    %p130 = scmp.eq.s32.totalorder %s15, 1
    %p131 = scmp.ne.s32.totalorder %s126, %s128
    %p132 = scmp.eq.s32.totalorder %s15, 0
    %p133 = por %p131, %p132
    %p134 = scmp.ne.s32.totalorder %s126, %s128
    %p135 = scmp.eq.s32.totalorder %s20, 1
    %p136 = por %p134, %p135
    %p137 = scmp.ne.s32.totalorder %s128, %s129
    %p138 = scmp.eq.s32.totalorder %s20, 0
    %p139 = por %p137, %p138
    %p140 = scmp.ne.s32.totalorder %s128, %s129
    %p141 = scmp.eq.s32.totalorder %s21, 1
    %p142 = por %p140, %p141
    %p144 = scmp.ne.s32.totalorder %s129, %s143
    %p145 = scmp.eq.s32.totalorder %s21, 0
    %p146 = por %p144, %p145
    %s148 = sadd.s32 %s147, 1
    %p151 = scmp.eq.s32.totalorder %s15, 1
    %p152 = scmp.ne.s32.totalorder %s147, %s149
    %p153 = scmp.eq.s32.totalorder %s15, 0
    %p154 = por %p152, %p153
    %p155 = scmp.ne.s32.totalorder %s147, %s149
    %p156 = scmp.eq.s32.totalorder %s20, 1
    %p157 = por %p155, %p156
    %p158 = scmp.ne.s32.totalorder %s149, %s150
    %p159 = scmp.eq.s32.totalorder %s20, 0
    %p160 = por %p158, %p159
    %p161 = scmp.ne.s32.totalorder %s149, %s150
    %p162 = scmp.eq.s32.totalorder %s21, 1
    %p163 = por %p161, %p162
    %p165 = scmp.ne.s32.totalorder %s150, %s164
    %p166 = scmp.eq.s32.totalorder %s21, 0
    %p167 = por %p165, %p166
    %s169 = sadd.s32 %s168, 1
    %p172 = scmp.eq.s32.totalorder %s15, 1
    %p173 = scmp.ne.s32.totalorder %s168, %s170
    %p174 = scmp.eq.s32.totalorder %s15, 0
    %p175 = por %p173, %p174
    %p176 = scmp.ne.s32.totalorder %s168, %s170
    %p177 = scmp.eq.s32.totalorder %s20, 1
    %p178 = por %p176, %p177
    %p179 = scmp.ne.s32.totalorder %s170, %s171
    %p180 = scmp.eq.s32.totalorder %s20, 0
    %p181 = por %p179, %p180
    %p182 = scmp.ne.s32.totalorder %s170, %s171
    %p183 = scmp.eq.s32.totalorder %s21, 1
    %p184 = por %p182, %p183
    %p186 = scmp.ne.s32.totalorder %s171, %s185
    %p187 = scmp.eq.s32.totalorder %s21, 0
    %p188 = por %p186, %p187
    %s189 = ssub.s32 %s22, %s34
    %s190 = ssub.s32 %s23, %s30
    %s191 = sor.u32 %s189, %s190
    %p192 = scmp.eq.s32.totalorder %s191, 0
    %s194 = sadd.s32 %s193, 1
    %s195 = scalar_select %p192, %s193, %s194
    %p198 = pneg %p192
    %p199 = scmp.eq.s32.totalorder %s15, 1
    %p200 = por %p198, %p199
    %p201 = scmp.ne.s32.totalorder %s193, %s196
    %p202 = scmp.eq.s32.totalorder %s15, 0
    %p203 = por %p201, %p202
    %p204 = scmp.ne.s32.totalorder %s193, %s196
    %p205 = scmp.eq.s32.totalorder %s20, 1
    %p206 = por %p204, %p205
    %p207 = scmp.ne.s32.totalorder %s196, %s197
    %p208 = scmp.eq.s32.totalorder %s20, 0
    %p209 = por %p207, %p208
    %p210 = scmp.ne.s32.totalorder %s196, %s197
    %p211 = scmp.eq.s32.totalorder %s21, 1
    %p212 = por %p210, %p211
    %p214 = scmp.ne.s32.totalorder %s197, %s213
    %p215 = scmp.eq.s32.totalorder %s21, 0
    %p216 = por %p214, %p215
    %s217 = ssub.s32 %s22, %s34
    %s218 = ssub.s32 %s23, %s30
    %s219 = sor.u32 %s217, %s218
    %p220 = scmp.eq.s32.totalorder %s219, 0
    %s222 = sadd.s32 %s221, 1
    %s223 = scalar_select %p220, %s221, %s222
    %p226 = pneg %p220
    %p227 = scmp.eq.s32.totalorder %s15, 1
    %p228 = por %p226, %p227
    %p229 = scmp.ne.s32.totalorder %s221, %s224
    %p230 = scmp.eq.s32.totalorder %s15, 0
    %p231 = por %p229, %p230
    %p232 = scmp.ne.s32.totalorder %s221, %s224
    %p233 = scmp.eq.s32.totalorder %s20, 1
    %p234 = por %p232, %p233
    %p235 = scmp.ne.s32.totalorder %s224, %s225
    %p236 = scmp.eq.s32.totalorder %s20, 0
    %p237 = por %p235, %p236
    %p238 = scmp.ne.s32.totalorder %s224, %s225
    %p239 = scmp.eq.s32.totalorder %s21, 1
    %p240 = por %p238, %p239
    %p242 = scmp.ne.s32.totalorder %s225, %s241
    %p243 = scmp.eq.s32.totalorder %s21, 0
    %p244 = por %p242, %p243
    %p245 = scmp.le.s32.totalorder 1, %s15
    %p246 = scmp.lt.s32.totalorder %s15, 3
    %p247 = pnand %p245, %p246
    %p248 = pneg %p247
    // Predicated region
    $region9: #{fsq_forward.1} parent=5 // pred_check
      _
    $region10: #{fsq_forward.1} parent=5 // pred_check_branch
      %250 = sbr.rel (%p247) target = $region12
    $region11: #{fsq_forward.1} parent=5 // pred_region
      %s251 = ssub.s32 %s15, 1
      // Predicated region
      $region13: #{fsq_forward.1} parent=11 // pred_check
        %p252 = pneg %p76
      $region14: #{fsq_forward.1} parent=11 // pred_check_branch
        %254 = sbr.rel (%p252) target = $region16
      $region15: #{fsq_forward.1} parent=11 // pred_region
        _
      $region16: #{fsq_forward.1} parent=11 // pred_fallthru
        _
      // Predicated region
      $region17: #{fsq_forward.1} parent=11 // pred_check
        %p255 = pneg %p97
      $region18: #{fsq_forward.1} parent=11 // pred_check_branch
        %257 = sbr.rel (%p255) target = $region20
      $region19: #{fsq_forward.1} parent=11 // pred_region
        _
      $region20: #{fsq_forward.1} parent=11 // pred_fallthru
        _
      // Predicated region
      $region21: #{fsq_forward.1} parent=11 // pred_check
        %p258 = pneg %p118
      $region22: #{fsq_forward.1} parent=11 // pred_check_branch
        %260 = sbr.rel (%p258) target = $region24
      $region23: #{fsq_forward.1} parent=11 // pred_region
        _
      $region24: #{fsq_forward.1} parent=11 // pred_fallthru
        _
      // Predicated region
      $region25: #{fsq_forward.1} parent=11 // pred_check
        %p261 = pneg %p139
      $region26: #{fsq_forward.1} parent=11 // pred_check_branch
        %263 = sbr.rel (%p261) target = $region28
      $region27: #{fsq_forward.1} parent=11 // pred_region
        _
      $region28: #{fsq_forward.1} parent=11 // pred_fallthru
        _
      // Predicated region
      $region29: #{fsq_forward.1} parent=11 // pred_check
        %p264 = pneg %p160
      $region30: #{fsq_forward.1} parent=11 // pred_check_branch
        %266 = sbr.rel (%p264) target = $region32
      $region31: #{fsq_forward.1} parent=11 // pred_region
        _
      $region32: #{fsq_forward.1} parent=11 // pred_fallthru
        _
      // Predicated region
      $region33: #{fsq_forward.1} parent=11 // pred_check
        %p267 = pneg %p181
      $region34: #{fsq_forward.1} parent=11 // pred_check_branch
        %269 = sbr.rel (%p267) target = $region36
      $region35: #{fsq_forward.1} parent=11 // pred_region
        _
      $region36: #{fsq_forward.1} parent=11 // pred_fallthru
        _
    $region12: #{fsq_forward.1} parent=5 // pred_fallthru
      _
    %p270 = scmp.lt.s32.totalorder %s15, 2
    // Predicated region
    $region37: #{fsq_forward.1} parent=5 // pred_check
      %p271 = pneg %p270
    $region38: #{fsq_forward.1} parent=5 // pred_check_branch
      %273 = sbr.rel (%p271) target = $region40
    $region39: #{fsq_forward.1} parent=5 // pred_region
      // Predicated region
      $region41: #{fsq_forward.1} parent=39 // pred_check
        %p274 = pneg %p49
      $region42: #{fsq_forward.1} parent=39 // pred_check_branch
        %276 = sbr.rel (%p274) target = $region44
      $region43: #{fsq_forward.1} parent=39 // pred_region
        %s277 = smul.u32 2, %s23
        %p278 = scmp.lt.s32.totalorder %s22, 1
        %s279 = scalar_select %p278, %s22, 1
        %p280 = scmp.lt.s32.totalorder %s277, 1
        %s281 = scalar_select %p280, %s277, 1
        %s282 = smul.addr %s279, 2
        %s283 = sadd.s32 %s281, %s282
        %s284 = smul.addr %s283, 8
        %s285 = scalar_lea.vmem %s0, %s284
        %s286 = smul.u32 2, %s23
      $region44: #{fsq_forward.1} parent=39 // pred_fallthru
        _
    $region40: #{fsq_forward.1} parent=5 // pred_fallthru
      _
    %p287 = scmp.le.s32.totalorder 1, %s15
    %p288 = scmp.lt.s32.totalorder %s15, 3
    %p289 = pnand %p287, %p288
    %p290 = pneg %p289
    // Predicated region
    $region45: #{fsq_forward.1} parent=5 // pred_check
      _
    $region46: #{fsq_forward.1} parent=5 // pred_check_branch
      %292 = sbr.rel (%p289) target = $region48
    $region47: #{fsq_forward.1} parent=5 // pred_region
      %s293 = ssub.s32 %s15, 1
      %s294 = smul.u32 2, %s25
      %p295 = scmp.lt.s32.totalorder %s24, 1
      %s296 = scalar_select %p295, %s24, 1
      %p297 = scmp.lt.s32.totalorder %s294, 1
      %s298 = scalar_select %p297, %s294, 1
      %s299 = smul.addr %s296, 2
      %s300 = sadd.s32 %s298, %s299
      %s301 = smul.addr %s300, 8
      %s302 = scalar_lea.vmem %s0, %s301
      %p303 = pneg %p55
      %p304 = pneg %p52
      %p305 = pneg %p76
      %p306 = pneg %p73
      %p307 = pneg %p97
      %p308 = pneg %p94
      %p309 = pneg %p118
      %p310 = pneg %p115
      %p311 = pneg %p139
      %p312 = pneg %p136
      %p313 = pneg %p160
      %p314 = pneg %p157
      %p315 = pneg %p181
      %p316 = pneg %p178
      %p317 = pneg %p209
      %p318 = pneg %p206
      %s319 = smul.u32 2, %s25
      %p320 = scmp.lt.s32.totalorder %s24, 1
      %s321 = scalar_select %p320, %s24, 1
      %p322 = scmp.lt.s32.totalorder %s319, 1
      %s323 = scalar_select %p322, %s319, 1
      %s324 = smul.addr %s321, 2
      %s325 = sadd.s32 %s323, %s324
      %s326 = smul.addr %s325, 8
      %s327 = scalar_lea.vmem %s7, %s326
      %p328 = pneg %p237
      %p329 = pneg %p234
      %s330 = smul.u32 2, %s25
      %p331 = scmp.lt.s32.totalorder %s24, 1
      %s332 = scalar_select %p331, %s24, 1
      %p333 = scmp.lt.s32.totalorder %s330, 1
      %s334 = scalar_select %p333, %s330, 1
      %s335 = smul.addr %s332, 2
      %s336 = sadd.s32 %s334, %s335
      %s337 = scalar_lea.vmem %s8, %s336
      %s338 = smul.u32 2, %s25
      %p339 = scmp.lt.s32.totalorder %s24, 1
      %s340 = scalar_select %p339, %s24, 1
      %p341 = scmp.lt.s32.totalorder %s338, 1
      %s342 = scalar_select %p341, %s338, 1
      %s343 = smul.addr %s340, 2
      %s344 = sadd.s32 %s342, %s343
      %s345 = smul.addr %s344, 8
      %s346 = scalar_lea.vmem %s0, %s345
      %s347 = smul.u32 2, %s25
      %s348 = smul.u32 2, %s25
      %p349 = scmp.lt.s32.totalorder %s24, 1
      %s350 = scalar_select %p349, %s24, 1
      %p351 = scmp.lt.s32.totalorder %s348, 1
      %s352 = scalar_select %p351, %s348, 1
      %s353 = smul.addr %s350, 2
      %s354 = sadd.s32 %s352, %s353
      %s355 = smul.addr %s354, 8
      %s356 = scalar_lea.vmem %s7, %s355
      %s357 = smul.u32 2, %s25
      %s358 = smul.u32 2, %s25
      %p359 = scmp.lt.s32.totalorder %s24, 1
      %s360 = scalar_select %p359, %s24, 1
      %p361 = scmp.lt.s32.totalorder %s358, 1
      %s362 = scalar_select %p361, %s358, 1
      %s363 = smul.addr %s360, 2
      %s364 = sadd.s32 %s362, %s363
      %s365 = scalar_lea.vmem %s8, %s364
      %s366 = smul.u32 2, %s25
      %v367 = vld [vmem:[%s346] sm:$0xff]
      %v368 = vld [vmem:[%s346 + $0x8] sm:$0xff]
      %v369 = vld [vmem:[%s1] sm:$0xff]
      %v370 = vld [vmem:[%s2] sm:$0xff]
      %372 = vset.pattern.permute.xlu0 0
      %373 = vperm.xlu0 %372, %v370
      %v374 = vpop.permute.xlu0 %373
      %vm376 = vcmask 64512
      %v378 = vsel %vm376, %v369, 0
      %380 = vmatprep.subr.mxu0 %v368
      %381 = vmatpush1.msra.mxu0 %v367
      %382 = vmatprep.subr.mxu0 0.0
      %383 = vmatpush1.msra.mxu0 0.0
      %384 = vmatprep.subr.mxu0 0.0
      %385 = vmatpush1.msra.mxu0 0.0
      %386 = vmatprep.subr.mxu0 0.0
      %387 = vmatpush1.msra.mxu0 0.0
      %388 = vmatprep.subr.mxu0 0.0
      %389 = vmatpush1.msra.mxu0 0.0
      %390 = vmatprep.subr.mxu0 0.0
      %391 = vmatpush1.msra.mxu0 0.0
      %392 = vmatprep.subr.mxu0 0.0
      %393 = vmatpush1.msra.mxu0 0.0
      %394 = vmatprep.subr.mxu0 0.0
      %395 = vmatpush1.msra.mxu0 0.0
      %396 = vmatprep.subr.mxu0 0.0
      %397 = vmatpush1.msra.mxu0 0.0
      %398 = vmatprep.subr.mxu0 0.0
      %399 = vmatpush1.msra.mxu0 0.0
      %400 = vmatprep.subr.mxu0 0.0
      %401 = vmatpush1.msra.mxu0 0.0
      %402 = vmatprep.subr.mxu0 0.0
      %403 = vmatpush1.msra.mxu0 0.0
      %404 = vmatprep.subr.mxu0 0.0
      %405 = vmatpush1.msra.mxu0 0.0
      %406 = vmatprep.subr.mxu0 0.0
      %407 = vmatpush1.msra.mxu0 0.0
      %408 = vmatprep.subr.mxu0 0.0
      %409 = vmatpush1.msra.mxu0 0.0
      %410 = vmatprep.subr.mxu0 0.0
      %411 = vmatpush1.msra.mxu0 0.0
      %412 = vmatprep.subr.mxu0 0.0
      %413 = vmatpush1.msra.mxu0 0.0
      %414 = vmatprep.subr.mxu0 0.0
      %415 = vmatpush1.msra.mxu0 0.0
      %416 = vmatprep.subr.mxu0 0.0
      %417 = vmatpush1.msra.mxu0 0.0
      %418 = vmatprep.subr.mxu0 0.0
      %419 = vmatpush1.msra.mxu0 0.0
      %420 = vmatprep.subr.mxu0 0.0
      %421 = vmatpush1.msra.mxu0 0.0
      %422 = vmatprep.subr.mxu0 0.0
      %423 = vmatpush1.msra.mxu0 0.0
      %424 = vmatprep.subr.mxu0 0.0
      %425 = vmatpush1.msra.mxu0 0.0
      %426 = vmatprep.subr.mxu0 0.0
      %427 = vmatpush1.msra.mxu0 0.0
      %428 = vmatprep.subr.mxu0 0.0
      %429 = vmatpush1.msra.mxu0 0.0
      %430 = vmatprep.subr.mxu0 0.0
      %431 = vmatpush1.msra.mxu0 0.0
      %432 = vmatprep.subr.mxu0 0.0
      %433 = vmatpush1.msra.mxu0 0.0
      %434 = vmatprep.subr.mxu0 0.0
      %435 = vmatpush1.msra.mxu0 0.0
      %436 = vmatprep.subr.mxu0 0.0
      %437 = vmatpush1.msra.mxu0 0.0
      %438 = vmatprep.subr.mxu0 0.0
      %439 = vmatpush1.msra.mxu0 0.0
      %440 = vmatprep.subr.mxu0 0.0
      %441 = vmatpush1.msra.mxu0 0.0
      %442 = vmatprep.subr.mxu0 0.0
      %443 = vmatpush1.msra.mxu0 0.0
      %444 = vmatprep.mubr.f32.mxu0 0.0
      %445 = vmatmul.mubr.f32.gmra.mrb[0].mxu0 %v378
      %v446 = vpop.f32.mrb[0].mxu0
      %v447 = vadd.f32 %v374, %v446
      %v448 = vpop.f32.mrb[0].mxu0
      %v449 = vadd.f32 %v374, %v448
      %450 = vdwg.mxu0
      %v451 = vtanh.pop %v447
      %v452 = vtanh.pop %v449
      %v453 = vld [vmem:[%s3] sm:$0xff]
      %455 = vset.pattern.permute.xlu0 0
      %456 = vperm.xlu0 %455, %v453
      %v457 = vpop.permute.xlu0 %456
      %v459 = vmul.f32 %v451, %v457
      %v460 = vmul.f32 %v452, %v457
      %v461 = vld [vmem:[%s4] sm:$0xff]
      %463 = vset.pattern.permute.xlu0 0
      %464 = vperm.xlu0 %463, %v461
      %v465 = vpop.permute.xlu0 %464
      %v467 = vsub.f32 %v459, %v465
      %v468 = vsub.f32 %v460, %v465
      %v469 = vround.ne.pseudo %v467
      %v470 = vround.ne.pseudo %v468
      %v471 = vld [vmem:[%s5] sm:$0xff]
      %v472 = vld [vmem:[%s5 + $0x8] sm:$0xff]
      %v473 = vld [vmem:[%s6] sm:$0xff]
      %v474 = vld [vmem:[%s6 + $0x8] sm:$0xff]
      %476 = vset.pattern.permute.xlu0 0
      %477 = vperm.xlu0 %476, %v473
      %v478 = vpop.permute.xlu0 %477
      %481 = vset.pattern.permute.xlu0 0
      %482 = vperm.xlu0 %481, %v474
      %v483 = vpop.permute.xlu0 %482
      %v486 = vsel %vm376, %v471, 0
      %v489 = vsel %vm376, %v472, 0
      %491 = vmatprep.subr.mxu0 %v470
      %492 = vmatpush1.msra.mxu0 %v469
      %493 = vmatprep.subr.mxu0 0.0
      %494 = vmatpush1.msra.mxu0 0.0
      %495 = vmatprep.subr.mxu0 0.0
      %496 = vmatpush1.msra.mxu0 0.0
      %497 = vmatprep.subr.mxu0 0.0
      %498 = vmatpush1.msra.mxu0 0.0
      %499 = vmatprep.subr.mxu0 0.0
      %500 = vmatpush1.msra.mxu0 0.0
      %501 = vmatprep.subr.mxu0 0.0
      %502 = vmatpush1.msra.mxu0 0.0
      %503 = vmatprep.subr.mxu0 0.0
      %504 = vmatpush1.msra.mxu0 0.0
      %505 = vmatprep.subr.mxu0 0.0
      %506 = vmatpush1.msra.mxu0 0.0
      %507 = vmatprep.subr.mxu0 0.0
      %508 = vmatpush1.msra.mxu0 0.0
      %509 = vmatprep.subr.mxu0 0.0
      %510 = vmatpush1.msra.mxu0 0.0
      %511 = vmatprep.subr.mxu0 0.0
      %512 = vmatpush1.msra.mxu0 0.0
      %513 = vmatprep.subr.mxu0 0.0
      %514 = vmatpush1.msra.mxu0 0.0
      %515 = vmatprep.subr.mxu0 0.0
      %516 = vmatpush1.msra.mxu0 0.0
      %517 = vmatprep.subr.mxu0 0.0
      %518 = vmatpush1.msra.mxu0 0.0
      %519 = vmatprep.subr.mxu0 0.0
      %520 = vmatpush1.msra.mxu0 0.0
      %521 = vmatprep.subr.mxu0 0.0
      %522 = vmatpush1.msra.mxu0 0.0
      %523 = vmatprep.subr.mxu0 0.0
      %524 = vmatpush1.msra.mxu0 0.0
      %525 = vmatprep.subr.mxu0 0.0
      %526 = vmatpush1.msra.mxu0 0.0
      %527 = vmatprep.subr.mxu0 0.0
      %528 = vmatpush1.msra.mxu0 0.0
      %529 = vmatprep.subr.mxu0 0.0
      %530 = vmatpush1.msra.mxu0 0.0
      %531 = vmatprep.subr.mxu0 0.0
      %532 = vmatpush1.msra.mxu0 0.0
      %533 = vmatprep.subr.mxu0 0.0
      %534 = vmatpush1.msra.mxu0 0.0
      %535 = vmatprep.subr.mxu0 0.0
      %536 = vmatpush1.msra.mxu0 0.0
      %537 = vmatprep.subr.mxu0 0.0
      %538 = vmatpush1.msra.mxu0 0.0
      %539 = vmatprep.subr.mxu0 0.0
      %540 = vmatpush1.msra.mxu0 0.0
      %541 = vmatprep.subr.mxu0 0.0
      %542 = vmatpush1.msra.mxu0 0.0
      %543 = vmatprep.subr.mxu0 0.0
      %544 = vmatpush1.msra.mxu0 0.0
      %545 = vmatprep.subr.mxu0 0.0
      %546 = vmatpush1.msra.mxu0 0.0
      %547 = vmatprep.subr.mxu0 0.0
      %548 = vmatpush1.msra.mxu0 0.0
      %549 = vmatprep.subr.mxu0 0.0
      %550 = vmatpush1.msra.mxu0 0.0
      %551 = vmatprep.subr.mxu0 0.0
      %552 = vmatpush1.msra.mxu0 0.0
      %553 = vmatprep.subr.mxu0 0.0
      %554 = vmatpush1.msra.mxu0 0.0
      %555 = vmatprep.mubr.f32.mxu0 0.0
      %556 = vmatmul.mubr.f32.gmra.mrb[0].mxu0 %v486
      %v557 = vpop.f32.mrb[0].mxu0
      %v558 = vadd.f32 %v478, %v557
      %v559 = vpop.f32.mrb[0].mxu0
      %v560 = vadd.f32 %v478, %v559
      %561 = vmatprep.mubr.f32.mxu0 0.0
      %562 = vmatmul.mubr.f32.gmra.mrb[0].mxu0 %v489
      %v563 = vpop.f32.mrb[0].mxu0
      %v564 = vadd.f32 %v483, %v563
      %v565 = vpop.f32.mrb[0].mxu0
      %v566 = vadd.f32 %v483, %v565
      %567 = vdwg.mxu0
      %568 = vst [vmem:[%s356] sm:$0xff] %v558
      %569 = vst [vmem:[%s356 + $0x8] sm:$0xff] %v560
      %v570 = vcvt.f32.s32.ties.to.even %v564
      %v571 = vcvt.f32.s32.ties.to.even %v566
      %v572 = vcombine.low %v570, %v571
      %v574 = vunpack.c.l.s4 1966171168
      %v575 = vunpack.c.0.s8 %v574
      %v576 = vlaneseq
      %v577 = vshrl.u32 %v576, 7
      %v578 = vsub.s32 %v575, %v577
      %v579 = vrot.slane %v572, %v578
      %v581 = vunpack.c.l.s4 1966171168
      %v582 = vunpack.c.0.s8 %v581
      %v583 = vlaneseq
      %v584 = vshrl.u32 %v583, 7
      %v585 = vsub.s32 %v582, %v584
      %v586 = vrot.slane %v579, %v585
      %v587 = vlaneseq
      %vm588 = vcmp.ge.s32.totalorder %v587, 0
      %vm589 = vcmp.lt.s32.totalorder %v587, 256
      %vm590 = vmand %vm588, %vm589
      %591 = vst.msk [vmem:[%s365] sm:$0x3] %vm590, %v586
      %s592 = smul.u32 2, %s25
      %p593 = scmp.lt.s32.totalorder %s24, 1
      %s594 = scalar_select %p593, %s24, 1
      %p595 = scmp.lt.s32.totalorder %s592, 1
      %s596 = scalar_select %p595, %s592, 1
      %s597 = smul.addr %s594, 2
      %s598 = sadd.s32 %s596, %s597
      %s599 = smul.addr %s598, 8
      %s600 = scalar_lea.vmem %s7, %s599
      %s601 = smul.u32 2, %s25
      %p602 = scmp.lt.s32.totalorder %s24, 1
      %s603 = scalar_select %p602, %s24, 1
      %p604 = scmp.lt.s32.totalorder %s601, 1
      %s605 = scalar_select %p604, %s601, 1
      %s606 = smul.addr %s603, 2
      %s607 = sadd.s32 %s605, %s606
      %s608 = scalar_lea.vmem %s8, %s607
      // Predicated region
      $region49: #{fsq_forward.1} parent=47 // pred_check
        %p609 = pneg %p206
      $region50: #{fsq_forward.1} parent=47 // pred_check_branch
        %611 = sbr.rel (%p609) target = $region52
      $region51: #{fsq_forward.1} parent=47 // pred_region
        %s612 = smul.u32 2, %s25
      $region52: #{fsq_forward.1} parent=47 // pred_fallthru
        _
      // Predicated region
      $region53: #{fsq_forward.1} parent=47 // pred_check
        %p613 = pneg %p234
      $region54: #{fsq_forward.1} parent=47 // pred_check_branch
        %615 = sbr.rel (%p613) target = $region56
      $region55: #{fsq_forward.1} parent=47 // pred_region
        %s616 = smul.u32 2, %s25
      $region56: #{fsq_forward.1} parent=47 // pred_fallthru
        _
    $region48: #{fsq_forward.1} parent=5 // pred_fallthru
      _
    %p617 = scmp.le.s32.totalorder 2, %s15
    // Predicated region
    $region57: #{fsq_forward.1} parent=5 // pred_check
      %p618 = pneg %p617
    $region58: #{fsq_forward.1} parent=5 // pred_check_branch
      %620 = sbr.rel (%p618) target = $region60
    $region59: #{fsq_forward.1} parent=5 // pred_region
      %s621 = ssub.s32 %s15, 2
      // Predicated region
      $region61: #{fsq_forward.1} parent=59 // pred_check
        %p622 = pneg %p212
      $region62: #{fsq_forward.1} parent=59 // pred_check_branch
        %624 = sbr.rel (%p622) target = $region64
      $region63: #{fsq_forward.1} parent=59 // pred_region
        %s625 = smul.u32 2, %s27
        %p626 = scmp.lt.s32.totalorder %s26, 1
        %s627 = scalar_select %p626, %s26, 1
        %p628 = scmp.lt.s32.totalorder %s625, 1
        %s629 = scalar_select %p628, %s625, 1
        %s630 = smul.addr %s627, 2
        %s631 = sadd.s32 %s629, %s630
        %s632 = smul.addr %s631, 8
        %s633 = scalar_lea.vmem %s7, %s632
      $region64: #{fsq_forward.1} parent=59 // pred_fallthru
        _
      // Predicated region
      $region65: #{fsq_forward.1} parent=59 // pred_check
        %p634 = pneg %p240
      $region66: #{fsq_forward.1} parent=59 // pred_check_branch
        %636 = sbr.rel (%p634) target = $region68
      $region67: #{fsq_forward.1} parent=59 // pred_region
        %s637 = smul.u32 2, %s27
        %p638 = scmp.lt.s32.totalorder %s26, 1
        %s639 = scalar_select %p638, %s26, 1
        %p640 = scmp.lt.s32.totalorder %s637, 1
        %s641 = scalar_select %p640, %s637, 1
        %s642 = smul.addr %s639, 2
        %s643 = sadd.s32 %s641, %s642
        %s644 = scalar_lea.vmem %s8, %s643
      $region68: #{fsq_forward.1} parent=59 // pred_fallthru
        _
    $region60: #{fsq_forward.1} parent=5 // pred_fallthru
      _
  $region6: #{fsq_forward.1} parent=0 // loop_footer
    %s19 = sadd.s32 1, %s15
  $region7: #{fsq_forward.1} parent=0 // loop_footer_branch
    %14 = sbr.rel target = $region3
  $region8: #{fsq_forward.1} parent=0 // loop_exit
    _

</llo_original>
